<compile_context>
chip_gen: v7x
topology: tpu7x:2x2x1
jax: 0.10.0
libtpu: 0.0.40
codegen_flags: <defaults>
</compile_context>

<pallas_src>
import functools

import jax
import jax.numpy as jnp
from jax import lax
from jax.experimental import pallas as pl
from jax.experimental.pallas import tpu as pltpu


_BUDGET_BYTES = 4 * 1024 * 1024      # per input VMEM buffer (double-buffered by Pallas)
_MAX_CHUNK_COLS = 8192               # caps the unrolled per-step add loop at 64 lane groups
_VMEM_LIMIT = 32 * 1024 * 1024       # generous but safe on v5e/v6e/v7x


def _round_up(x, m):
    return ((x + m - 1) // m) * m


# --------------------------------------------------------------------------- #
# Kernels
# --------------------------------------------------------------------------- #
def _gap_kernel_single(x_ref, o_ref, *, inv_hw):
    """One reduction chunk covers the whole HW axis: sum, scale, store."""
    # x_ref: (tr, HW); o_ref: (1, tr) lane-dense output tile.
    s = jnp.sum(x_ref[...], axis=1, dtype=jnp.float32)          # (tr,)
    o_ref[...] = (s * inv_hw)[None, :].astype(o_ref.dtype)


def _gap_kernel_multi(x_ref, o_ref, acc_ref, *, inv_hw, thw, rem):
    """HW is split into 128-aligned chunks along the 'arbitrary' grid axis.

    x_ref:   (tr, thw)  current HW chunk (last chunk has `rem` valid columns)
    o_ref:   (1, tr)    lane-dense output tile, resident across the k axis
    acc_ref: (tr, 128)  f32 per-lane-group partial sums (VALU-only hot loop)
    """
    k = pl.program_id(1)
    nk = pl.num_programs(1)

    @pl.when(k == 0)
    def _init():
        acc_ref[...] = jnp.zeros_like(acc_ref)

    def _accum(valid):
        # Accumulate the leading `valid` columns of this chunk using only
        # lane-aligned static slices + VALU adds (no per-step XLU reduce).
        part = None
        for lo in range(0, thw, 128):
            if lo >= valid:
                break
            chunk = x_ref[:, lo:lo + 128].astype(jnp.float32)
            if lo + 128 > valid:
                lane = lax.broadcasted_iota(jnp.int32, chunk.shape, 1)
                chunk = jnp.where(lane < (valid - lo), chunk, 0.0)
            part = chunk if part is None else part + chunk
        acc_ref[...] += part

    if rem == thw:                       # HW divides evenly into chunks
        _accum(thw)
    else:
        @pl.when(k < nk - 1)
        def _full_chunk():
            _accum(thw)

        @pl.when(k == nk - 1)
        def _ragged_last_chunk():
            _accum(rem)

    @pl.when(k == nk - 1)
    def _finalize():
        s = jnp.sum(acc_ref[...], axis=1)                        # (tr,) f32
        o_ref[...] = (s * inv_hw)[None, :].astype(o_ref.dtype)


# --------------------------------------------------------------------------- #
# Wrapper
# --------------------------------------------------------------------------- #
def global_avg_pool2d(x):
    """F.avg_pool2d(x, (H, W)) equivalent: global average over spatial dims."""
    N, C, H, W = x.shape
    R, HW = N * C, H * W
    x2 = x.reshape(R, HW)                    # free for contiguous NCHW

    itemsize = x.dtype.itemsize
    sub = max(8, 32 // itemsize)             # sublane packing: 8 f32 / 16 bf16 / 32 int8

    def vmem_bytes(rows, cols):              # lane/sublane-padded VMEM footprint
        return _round_up(rows, sub) * _round_up(cols, 128) * itemsize

    inv_hw = 1.0 / float(HW)
    cost = pl.CostEstimate(
        flops=R * HW,
        transcendentals=0,
        bytes_accessed=R * HW * itemsize + R * itemsize,
    )
    cparams_kw = dict(vmem_limit_bytes=_VMEM_LIMIT)

    if vmem_bytes(min(R, 128), HW) <= _BUDGET_BYTES:
        # ---- single reduction chunk per row block: thw == HW ----------------
        thw = HW
        if R <= 128:
            tr = R                                            # full-dim block
        else:
            rows_cap = (_BUDGET_BYTES // (_round_up(HW, 128) * itemsize)) // 128 * 128
            rows_want = _round_up(pl.cdiv(R, 4), 128)         # >=4 row blocks if possible
            tr = max(128, min(rows_cap, rows_want))
        grid_r = pl.cdiv(R, tr)

        kernel = functools.partial(_gap_kernel_single, inv_hw=inv_hw)
        out_row = pl.pallas_call(
            kernel,
            out_shape=jax.ShapeDtypeStruct((1, R), x.dtype),
            grid_spec=pltpu.PrefetchScalarGridSpec(
                num_scalar_prefetch=0,
                grid=(grid_r,),
                in_specs=[pl.BlockSpec((tr, thw), lambda i: (i, 0))],
                out_specs=pl.BlockSpec((1, tr), lambda i: (0, i)),
            ),
            compiler_params=pltpu.CompilerParams(
                dimension_semantics=("parallel",), **cparams_kw),
            cost_estimate=cost,
        )(x2)
    else:
        # ---- HW too wide for a single in-budget block: chunk the reduction --
        tr = R if R <= 128 else 128
        cols_cap = (_BUDGET_BYTES // (_round_up(tr, sub) * itemsize)) // 128 * 128
        thw_cap = max(128, min(cols_cap, _MAX_CHUNK_COLS))
        num_k = pl.cdiv(HW, thw_cap)
        thw = _round_up(pl.cdiv(HW, num_k), 128)              # rebalance chunk width
        num_k = pl.cdiv(HW, thw)
        rem = HW - (num_k - 1) * thw                          # valid cols in last chunk
        grid_r = pl.cdiv(R, tr)

        kernel = functools.partial(_gap_kernel_multi, inv_hw=inv_hw, thw=thw, rem=rem)
        out_row = pl.pallas_call(
            kernel,
            out_shape=jax.ShapeDtypeStruct((1, R), x.dtype),
            grid_spec=pltpu.PrefetchScalarGridSpec(
                num_scalar_prefetch=0,
                grid=(grid_r, num_k),
                in_specs=[pl.BlockSpec((tr, thw), lambda i, k: (i, k))],
                out_specs=pl.BlockSpec((1, tr), lambda i, k: (0, i)),
                scratch_shapes=[pltpu.VMEM((tr, 128), jnp.float32)],
            ),
            compiler_params=pltpu.CompilerParams(
                dimension_semantics=("parallel", "arbitrary"), **cparams_kw),
            cost_estimate=cost,
        )(x2)

    return out_row[0].reshape(N, C, 1, 1)


# --------------------------------------------------------------------------- #
# Self-test
# --------------------------------------------------------------------------- #
if __name__ == "__main__":
    key = jax.random.PRNGKey(0)

    cases = [
        (2, 4, 16, 16),      # tiny: single full-dim block fast path
        (2, 3, 7, 7),        # ragged HW (49 lanes), full-dim block
        (2, 100, 14, 14),    # row-tiled path with a ragged last row block
        (2, 4, 500, 300),    # chunked-HW path with masked ragged last chunk
    ]
    for idx, shape in enumerate(cases):
        xk = jax.random.normal(jax.random.fold_in(key, idx), shape, dtype=jnp.float32)
        out = jax.block_until_ready(global_avg_pool2d(xk))
        ref = jnp.mean(xk, axis=(2, 3), keepdims=True)
        assert out.shape == ref.shape, (shape, out.shape, ref.shape)
        assert jnp.allclose(out, ref, atol=1e-5, rtol=1e-5), f"mismatch for {shape}"

    print("KERNEL_OK")
</pallas_src>

<mosaic_0001>
module attributes {stable_mosaic.version = 11 : i64} {
  func.func @_gap_kernel_single(%arg0: i32, %arg1: memref<8x256xf32, #tpu.memory_space<vmem>>, %arg2: memref<1x8xf32, #tpu.memory_space<vmem>>) attributes {dimension_semantics = [#tpu.dimension_semantics<parallel>], iteration_bounds = array<i64: 1>, scalar_prefetch = 0 : i64, scratch_operands = 0 : i64, tpu.core_type = #tpu.core_type<tc>, window_params = [{transform_indices = @transform_0, window_bounds = array<i64: 8, 256>}, {transform_indices = @transform_1, window_bounds = array<i64: 1, 8>}]} {
    %c0 = arith.constant 0 : index
    %c0_0 = arith.constant 0 : index
    %0 = vector.load %arg1[%c0, %c0_0] : memref<8x256xf32, #tpu.memory_space<vmem>>, vector<8x256xf32>
    %cst = arith.constant dense<0.000000e+00> : vector<8xf32>
    %1 = vector.multi_reduction <add>, %0, %cst [1] : vector<8x256xf32> to vector<8xf32>
    %cst_1 = arith.constant 3.906250e-03 : f32
    %2 = vector.broadcast %cst_1 : f32 to vector<8xf32>
    %3 = arith.mulf %1, %2 : vector<8xf32>
    %4 = vector.shape_cast %3 : vector<8xf32> to vector<1x8xf32>
    %c0_2 = arith.constant 0 : index
    %c0_3 = arith.constant 0 : index
    %5 = vector.load %arg2[%c0_2, %c0_3] : memref<1x8xf32, #tpu.memory_space<vmem>>, vector<1x8xf32>
    tpu.vector_store %arg2[%c0_2, %c0_3], %4 {strides = array<i32>} : memref<1x8xf32, #tpu.memory_space<vmem>>, vector<1x8xf32>,
    return
  }
  func.func @transform_0(%arg0: i32) -> (i32, i32) {
    %c0_i32 = arith.constant 0 : i32
    %c0_i32_0 = arith.constant 0 : i32
    return %arg0, %c0_i32 : i32, i32
  }
  func.func @transform_1(%arg0: i32) -> (i32, i32) {
    %c0_i32 = arith.constant 0 : i32
    %c0_i32_0 = arith.constant 0 : i32
    return %c0_i32, %arg0 : i32, i32
  }
}

</mosaic_0001>

<llo_original>
// kernel: tpu_custom_call.1
$region0: #{tpu_custom_call.1}
  #allocation0 [shape = 'u32[]', space=smem, size = 0x4, offset = 0x4, fixed_abs, tag = 'smem constant byte address 0x4 - core index']
  #allocation1 [shape = 'u32[144,128]{1,0:T(1,128)}', space=vmem, size = 0x12000, scoped, tag = 'internal scratch']
  %s0 = inlined_call_operand.hbm [shape: f32[8,256], index: 0, kind: input, shape index: {}]
  %s1 = inlined_call_operand.hbm [shape: f32[1,8], index: 1, kind: output, shape index: {}]
  %s2 = sld [smem:[#allocation0]]
  $region18: #{tpu_custom_call.1} parent=0
    _
  %s4 = ssub.s32 1, %s2
  %s5 = scalar_select 0, %s4, %s2
  $region1: #{tpu_custom_call.1} parent=0
    #allocation2 [shape = 'u8[8192]{0}', space=vmem, size = 0x2000, scoped, tag = 'input window, operand 0, single buffered']
    #allocation3 [shape = 's32[1]{0}', space=sflag, size = 0x4, scoped, tag = 'scoped memory for tpu_custom_call.1']
    #allocation4 [shape = 's32[1]{0}', space=sflag, size = 0x4, scoped, tag = 'scoped memory for tpu_custom_call.1']
    #allocation5 [shape = 'u8[512]{0}', space=vmem, size = 0x400, scoped, tag = 'output window, operand 0, single buffered']
    %6 = vsyncpa [#allocation3], 0
    %7 = vsyncpa [#allocation4], 0
    // Predicated region
    $region2: #{tpu_custom_call.1} parent=1 // pred_check
      _
    $region3: #{tpu_custom_call.1} parent=1 // pred_check_branch
      %9 = sbr.rel (0) target = $region5
    $region4: #{tpu_custom_call.1} parent=1 // pred_region
      %s11 = ssub.s32 256, 256
      %12 = vsyncadd [#allocation3], %s11
      %s14 = sshll.u32 [#allocation2], 4
      %s15 = int_to_ptr.vmem [resolvable:$true] %s14
      %17 = dma.hbm_to_vmem [thread:$0]  %s0, 256, %s15, [#allocation3]
    $region5: #{tpu_custom_call.1} parent=1 // pred_fallthru
      _
    // Predicated region
    $region6: #{tpu_custom_call.1} parent=1 // pred_check
      _
    $region7: #{tpu_custom_call.1} parent=1 // pred_check_branch
      %19 = sbr.rel (0) target = $region9
    $region8: #{tpu_custom_call.1} parent=1 // pred_region
      %20 = dma.done [#allocation3], 256
    $region9: #{tpu_custom_call.1} parent=1 // pred_fallthru
      _
    %v21 = vld [vmem:[#allocation2] sm:$0xff]
    %v22 = vld [vmem:[#allocation2 + $0x8] sm:$0xff]
    %v23 = vadd.f32 %v21, %v22
    %24 = vadd.xlane.f32.xlu0 %v23
    %v25 = vpop.xlane.xlu0 %24
    %v26 = vmul.f32 %v25, 0.00390625
    %v28 = vlaneseq
    %v29 = vand.u32 %v28, 127
    %v30 = vlaneseq
    %v31 = vshrl.u32 %v30, 7
    %v32 = vsub.s32 %v29, %v31
    %v33 = vrot.slane %v26, %v32
    %vm35 = vcmask 57344
    %36 = vst.msk [vmem:[#allocation5] sm:$0x1] %vm35, %v33
    // Predicated region
    $region10: #{tpu_custom_call.1} parent=1 // pred_check
      _
    $region11: #{tpu_custom_call.1} parent=1 // pred_check_branch
      %38 = sbr.rel (0) target = $region13
    $region12: #{tpu_custom_call.1} parent=1 // pred_region
      %s40 = ssub.s32 16, 16
      %41 = vsyncadd [#allocation4], %s40
      %s43 = sshll.u32 [#allocation5], 4
      %s44 = int_to_ptr.vmem [resolvable:$true] %s43
      %46 = dma.vmem_to_hbm [thread:$0]  %s44, 16, %s1, [#allocation4]
    $region13: #{tpu_custom_call.1} parent=1 // pred_fallthru
      _
    // Predicated region
    $region14: #{tpu_custom_call.1} parent=1 // pred_check
      _
    $region15: #{tpu_custom_call.1} parent=1 // pred_check_branch
      %48 = sbr.rel (0) target = $region17
    $region16: #{tpu_custom_call.1} parent=1 // pred_region
      %49 = dma.done [#allocation4], 16
    $region17: #{tpu_custom_call.1} parent=1 // pred_fallthru
      _
    %50 = vsyncpa [#allocation3], 1
    %51 = vsyncpa [#allocation4], 1

</llo_original>
